<compile_context>
chip_gen: v7x
topology: tpu7x:2x2x1
jax: 0.10.0
libtpu: 0.0.40
codegen_flags: <defaults>
</compile_context>

<pallas_src>
import functools

import jax
import jax.numpy as jnp
from jax.experimental import pallas as pl
from jax.experimental.pallas import tpu as pltpu


def _round_up(v, m):
    return ((v + m - 1) // m) * m


_VMEM_FALLBACK = 64 * 1024 * 1024  # conservative (v7x per-TC capacity)


def _vmem_budget_bytes():
    """Per-generation VMEM budget (v5e/v6e: 128 MiB, v7x: 64 MiB per TC),
    keeping ~25% headroom for Mosaic-internal scratch."""
    try:
        cap = int(pltpu.get_tpu_info().vmem_capacity_bytes)
    except Exception:  # hardware query unavailable -> conservative default
        cap = _VMEM_FALLBACK
    return (3 * cap) // 4


def _tile_bytes(tb, kdim, n_out):
    # double-buffered f32 x tile + double-buffered f32 out tile + f32 acc
    return 2 * tb * kdim * 4 + 2 * tb * n_out * 4 + tb * n_out * 4


def _pick_tb(B, kdim, n_out, w_block_bytes, budget):
    """Largest batch tile (multiple of 8, <=1024) that fits the VMEM budget
    next to the (double-buffered) resident weight block."""
    avail = budget - 2 * w_block_bytes - 2 * 1024 * 1024
    per_row = 2 * kdim * 4 + 2 * n_out * 4 + n_out * 4
    tb_cap = max(8, avail // max(per_row, 1))
    tb = int(min(1024, tb_cap, _round_up(B, 8)))
    return max(8, (tb // 8) * 8)


# ---------------------------------------------------------------------------
# Kernels
# ---------------------------------------------------------------------------

def _classifier_kernel_resident(x_ref, scale_ref, shift_ref, wt_ref, b_ref,
                                o_ref):
    # BN (folded affine) + ReLU in f32 on the VPU; x arrives in native f32.
    h = jnp.maximum(x_ref[...] * scale_ref[...] + shift_ref[...], 0.0)
    # MXU consumes bf16 directly, accumulates in f32.
    o = jnp.dot(h.astype(jnp.bfloat16), wt_ref[...],
                preferred_element_type=jnp.float32)
    o_ref[...] = (o + b_ref[...]).astype(o_ref.dtype)


def _classifier_kernel_ktiled(x_ref, scale_ref, shift_ref, wt_ref, b_ref,
                              o_ref, acc_ref, *, n_in, tk):
    k = pl.program_id(1)

    @pl.when(k == 0)
    def _():
        acc_ref[...] = jnp.zeros_like(acc_ref)

    h = jnp.maximum(x_ref[...] * scale_ref[...] + shift_ref[...], 0.0)
    if n_in % tk != 0:
        # Ragged K tail: the last x block reads past n_in (stale VMEM).  The
        # padded W rows are zero, but force these h columns to a finite 0 so
        # stale NaN/Inf bits cannot leak into the accumulator.
        col = k * tk + jax.lax.broadcasted_iota(jnp.int32, h.shape, 1)
        h = jnp.where(col < n_in, h, 0.0)

    acc_ref[...] += jnp.dot(h.astype(jnp.bfloat16), wt_ref[...],
                            preferred_element_type=jnp.float32)

    @pl.when(k == pl.num_programs(1) - 1)
    def _():
        o_ref[...] = (acc_ref[...] + b_ref[...]).astype(o_ref.dtype)


# ---------------------------------------------------------------------------
# One-time parameter preparation (hoisted out of the per-forward path)
# ---------------------------------------------------------------------------

def prepare_classifier_params(gamma, beta, running_mean, running_var, w, b,
                              *, eps=1e-5, force_tk=None):
    """Fold eval-mode BatchNorm1d into per-feature scale/shift, store the
    Linear weight transposed ([n_in, n_out]) in bf16 for the MXU, and decide
    the execution path (resident W vs. K-tiled accumulator) from the VMEM
    budget.  `w` is the PyTorch Linear weight, shape [n_out, n_in]."""
    n_out, n_in = w.shape
    scale = (gamma.astype(jnp.float32)
             / jnp.sqrt(running_var.astype(jnp.float32) + eps))
    shift = beta.astype(jnp.float32) - running_mean.astype(jnp.float32) * scale
    wt = jnp.transpose(w).astype(jnp.bfloat16)          # [n_in, n_out]
    b2d = b.astype(jnp.float32).reshape(1, n_out)

    budget = _vmem_budget_bytes()
    w_bytes = 2 * n_in * n_out                           # resident bf16 W
    resident_fits = 2 * w_bytes + _tile_bytes(128, n_in, n_out) <= budget

    if force_tk is None and resident_fits:
        tk = None
    else:
        # K-tiled accumulator path (very large heads / v7x 64 MiB VMEM):
        # keep the per-step W block around <= 8 MiB, tk a multiple of 128.
        if force_tk is not None:
            tk = int(force_tk)
        else:
            tk = max(128, ((8 * 1024 * 1024) // (2 * n_out)) // 128 * 128)
        tk = min(tk, _round_up(n_in, 128))
        n_in_pad = _round_up(n_in, tk)
        # One-time zero-padding along K so W / scale / shift blocks are never
        # ragged (zero rows contribute nothing to valid outputs).
        wt = jnp.zeros((n_in_pad, n_out), jnp.bfloat16).at[:n_in].set(wt)
        scale = jnp.zeros((n_in_pad,), jnp.float32).at[:n_in].set(scale)
        shift = jnp.zeros((n_in_pad,), jnp.float32).at[:n_in].set(shift)

    return {
        "n_in": n_in,
        "n_out": n_out,
        "tk": tk,
        "vmem_budget": budget,
        "scale": scale.reshape(1, -1),
        "shift": shift.reshape(1, -1),
        "wt": wt,
        "b": b2d,
    }


# ---------------------------------------------------------------------------
# Forward
# ---------------------------------------------------------------------------

def classifier_forward(x, params, *, tb=None, out_dtype=jnp.float32):
    """x: [B, n_in].  Returns relu(batchnorm_eval(x)) @ W^T + b, [B, n_out]."""
    B, n_in = x.shape
    assert n_in == params["n_in"], "feature dim mismatch"
    n_out = params["n_out"]
    tk = params["tk"]
    budget = params["vmem_budget"]
    scale, shift, wt, b2d = (params["scale"], params["shift"],
                             params["wt"], params["b"])

    kdim = n_in if tk is None else tk
    w_block_bytes = (wt.shape[0] * n_out * 2) if tk is None else (tk * n_out * 2)
    if tb is None:
        tb = _pick_tb(B, kdim, n_out, w_block_bytes, budget)
    tb = max(8, (int(tb) // 8) * 8)
    nb = pl.cdiv(B, tb)

    x = x.astype(jnp.float32)
    compiler_params_kwargs = dict(vmem_limit_bytes=int(budget))

    if tk is None:
        # Path A: fully resident bf16 W, batch streamed in f32.
        return pl.pallas_call(
            _classifier_kernel_resident,
            out_shape=jax.ShapeDtypeStruct((B, n_out), out_dtype),
            grid_spec=pltpu.PrefetchScalarGridSpec(
                num_scalar_prefetch=0,
                grid=(nb,),
                in_specs=[
                    pl.BlockSpec((tb, n_in), lambda i: (i, 0)),     # x (streamed)
                    pl.BlockSpec((1, n_in), lambda i: (0, 0)),      # BN scale
                    pl.BlockSpec((1, n_in), lambda i: (0, 0)),      # BN shift
                    pl.BlockSpec((n_in, n_out), lambda i: (0, 0)),  # W^T (resident)
                    pl.BlockSpec((1, n_out), lambda i: (0, 0)),     # bias
                ],
                out_specs=pl.BlockSpec((tb, n_out), lambda i: (i, 0)),
            ),
            compiler_params=pltpu.CompilerParams(
                dimension_semantics=("parallel",),
                **compiler_params_kwargs,
            ),
        )(x, scale, shift, wt, b2d)

    # Path B: K-tiled reduction with f32 VMEM accumulator (K axis last,
    # "arbitrary"); used when the resident W exceeds the VMEM budget.
    n_in_pad = wt.shape[0]
    nk = n_in_pad // tk
    kernel = functools.partial(_classifier_kernel_ktiled, n_in=n_in, tk=tk)
    return pl.pallas_call(
        kernel,
        out_shape=jax.ShapeDtypeStruct((B, n_out), out_dtype),
        grid_spec=pltpu.PrefetchScalarGridSpec(
            num_scalar_prefetch=0,
            grid=(nb, nk),
            in_specs=[
                pl.BlockSpec((tb, tk), lambda i, k: (i, k)),      # x tile
                pl.BlockSpec((1, tk), lambda i, k: (0, k)),       # BN scale tile
                pl.BlockSpec((1, tk), lambda i, k: (0, k)),       # BN shift tile
                pl.BlockSpec((tk, n_out), lambda i, k: (k, 0)),   # W^T K-tile
                pl.BlockSpec((1, n_out), lambda i, k: (0, 0)),    # bias
            ],
            out_specs=pl.BlockSpec((tb, n_out), lambda i, k: (i, 0)),
            scratch_shapes=[pltpu.VMEM((tb, n_out), jnp.float32)],
        ),
        compiler_params=pltpu.CompilerParams(
            dimension_semantics=("parallel", "arbitrary"),
            **compiler_params_kwargs,
        ),
    )(x, scale, shift, wt, b2d)


# ---------------------------------------------------------------------------
# Reference + test harness
# ---------------------------------------------------------------------------

def reference_forward(x, gamma, beta, running_mean, running_var, w, b,
                      eps=1e-5):
    """Pure-JAX reference mirroring the kernel dtype policy (f32 BN/ReLU,
    bf16 MXU operands, f32 accumulation)."""
    scale = gamma / jnp.sqrt(running_var + eps)
    shift = beta - running_mean * scale
    h = jnp.maximum(x * scale + shift, 0.0)
    return jnp.dot(h.astype(jnp.bfloat16), w.T.astype(jnp.bfloat16),
                   preferred_element_type=jnp.float32) + b


def init_params(key, n_in, n_out):
    k = jax.random.split(key, 6)
    # BatchNorm1d affine params + running stats (eval mode).
    gamma = jax.random.uniform(k[0], (n_in,), jnp.float32, 0.5, 1.5)
    beta = 0.1 * jax.random.normal(k[1], (n_in,), jnp.float32)
    running_mean = 0.5 * jax.random.normal(k[2], (n_in,), jnp.float32)
    running_var = jax.random.uniform(k[3], (n_in,), jnp.float32, 0.5, 1.5)
    # nn.Linear(n_in, n_out): uniform(-1/sqrt(n_in), 1/sqrt(n_in)), PyTorch layout.
    bound = 1.0 / (n_in ** 0.5)
    w = jax.random.uniform(k[4], (n_out, n_in), jnp.float32, -bound, bound)
    b = jax.random.uniform(k[5], (n_out,), jnp.float32, -bound, bound)
    return gamma, beta, running_mean, running_var, w, b


if __name__ == "__main__":
    key = jax.random.PRNGKey(0)
    kx, kp, kx2, kp2 = jax.random.split(key, 4)

    # --- Path A: resident-W head (feature dims deliberately not x128) -------
    n_in, n_out, batch = 48, 10, 64
    x = jax.random.normal(kx, (batch, n_in), jnp.float32)
    gamma, beta, rm, rv, w, b = init_params(kp, n_in, n_out)
    params = prepare_classifier_params(gamma, beta, rm, rv, w, b)

    out = classifier_forward(x, params)
    jax.block_until_ready(out)
    assert out.shape == (batch, n_out)
    ref = reference_forward(x, gamma, beta, rm, rv, w, b)
    assert jnp.allclose(out, ref, atol=3e-2, rtol=3e-2), "path A mismatch"

    # Ragged batch tail (B not a multiple of tb) — exercises masked tile.
    out_r = classifier_forward(x[:52], params, tb=32)
    jax.block_until_ready(out_r)
    assert jnp.allclose(out_r, ref[:52], atol=3e-2, rtol=3e-2), \
        "path A ragged-batch mismatch"

    # --- Path B: K-tiled accumulator (forced small tk to exercise it) -------
    n_in2, n_out2, batch2 = 200, 24, 40
    x2 = jax.random.normal(kx2, (batch2, n_in2), jnp.float32)
    gamma2, beta2, rm2, rv2, w2, b2 = init_params(kp2, n_in2, n_out2)
    params2 = prepare_classifier_params(gamma2, beta2, rm2, rv2, w2, b2,
                                        force_tk=128)
    out2 = classifier_forward(x2, params2, tb=16)
    jax.block_until_ready(out2)
    ref2 = reference_forward(x2, gamma2, beta2, rm2, rv2, w2, b2)
    assert out2.shape == (batch2, n_out2)
    assert jnp.allclose(out2, ref2, atol=3e-2, rtol=3e-2), "path B mismatch"

    print("KERNEL_OK")
</pallas_src>

<mosaic_0001>
module attributes {stable_mosaic.version = 11 : i64} {
  func.func @_classifier_kernel_resident(%arg0: i32, %arg1: memref<64x48xf32, #tpu.memory_space<vmem>>, %arg2: memref<1x48xf32, #tpu.memory_space<vmem>>, %arg3: memref<1x48xf32, #tpu.memory_space<vmem>>, %arg4: memref<48x10xbf16, #tpu.memory_space<vmem>>, %arg5: memref<1x10xf32, #tpu.memory_space<vmem>>, %arg6: memref<64x10xf32, #tpu.memory_space<vmem>>) attributes {dimension_semantics = [#tpu.dimension_semantics<parallel>], iteration_bounds = array<i64: 1>, scalar_prefetch = 0 : i64, scratch_operands = 0 : i64, tpu.core_type = #tpu.core_type<tc>, window_params = [{transform_indices = @transform_0, window_bounds = array<i64: 64, 48>}, {pipeline_mode = #tpu.pipeline_mode<synchronous>, transform_indices = @transform_1, window_bounds = array<i64: 1, 48>}, {pipeline_mode = #tpu.pipeline_mode<synchronous>, transform_indices = @transform_2, window_bounds = array<i64: 1, 48>}, {pipeline_mode = #tpu.pipeline_mode<synchronous>, transform_indices = @transform_3, window_bounds = array<i64: 48, 10>}, {pipeline_mode = #tpu.pipeline_mode<synchronous>, transform_indices = @transform_4, window_bounds = array<i64: 1, 10>}, {transform_indices = @transform_5, window_bounds = array<i64: 64, 10>}]} {
    %c0 = arith.constant 0 : index
    %c0_0 = arith.constant 0 : index
    %0 = vector.load %arg1[%c0, %c0_0] : memref<64x48xf32, #tpu.memory_space<vmem>>, vector<64x48xf32>
    %c0_1 = arith.constant 0 : index
    %c0_2 = arith.constant 0 : index
    %1 = vector.load %arg2[%c0_1, %c0_2] : memref<1x48xf32, #tpu.memory_space<vmem>>, vector<1x48xf32>
    %2 = vector.broadcast %1 : vector<1x48xf32> to vector<64x48xf32>
    %3 = arith.mulf %0, %2 : vector<64x48xf32>
    %c0_3 = arith.constant 0 : index
    %c0_4 = arith.constant 0 : index
    %4 = vector.load %arg3[%c0_3, %c0_4] : memref<1x48xf32, #tpu.memory_space<vmem>>, vector<1x48xf32>
    %5 = vector.broadcast %4 : vector<1x48xf32> to vector<64x48xf32>
    %6 = arith.addf %3, %5 : vector<64x48xf32>
    %cst = arith.constant 0.000000e+00 : f32
    %7 = vector.broadcast %cst : f32 to vector<64x48xf32>
    %8 = arith.maximumf %6, %7 : vector<64x48xf32>
    %9 = arith.truncf %8 : vector<64x48xf32> to vector<64x48xbf16>
    %c0_5 = arith.constant 0 : index
    %c0_6 = arith.constant 0 : index
    %10 = vector.load %arg4[%c0_5, %c0_6] : memref<48x10xbf16, #tpu.memory_space<vmem>>, vector<48x10xbf16>
    %cst_7 = arith.constant dense<0.000000e+00> : vector<64x10xf32>
    %11 = tpu.matmul %9, %10, %cst_7 {dimension_numbers = #tpu.dot_dimension_numbers<[1], [0], [0], [1], [0, 0, 1, 1], [], []>} : vector<64x48xbf16>, vector<48x10xbf16>, vector<64x10xf32> -> vector<64x10xf32>
    %c0_8 = arith.constant 0 : index
    %c0_9 = arith.constant 0 : index
    %12 = vector.load %arg5[%c0_8, %c0_9] : memref<1x10xf32, #tpu.memory_space<vmem>>, vector<1x10xf32>
    %13 = vector.broadcast %12 : vector<1x10xf32> to vector<64x10xf32>
    %14 = arith.addf %11, %13 : vector<64x10xf32>
    %c0_10 = arith.constant 0 : index
    %c0_11 = arith.constant 0 : index
    %15 = vector.load %arg6[%c0_10, %c0_11] : memref<64x10xf32, #tpu.memory_space<vmem>>, vector<64x10xf32>
    tpu.vector_store %arg6[%c0_10, %c0_11], %14 {strides = array<i32>} : memref<64x10xf32, #tpu.memory_space<vmem>>, vector<64x10xf32>,
    return
  }
  func.func @transform_0(%arg0: i32) -> (i32, i32) {
    %c0_i32 = arith.constant 0 : i32
    %c0_i32_0 = arith.constant 0 : i32
    return %arg0, %c0_i32 : i32, i32
  }
  func.func @transform_1(%arg0: i32) -> (i32, i32) {
    %c0_i32 = arith.constant 0 : i32
    %c0_i32_0 = arith.constant 0 : i32
    %c0_i32_1 = arith.constant 0 : i32
    return %c0_i32, %c0_i32_0 : i32, i32
  }
  func.func @transform_2(%arg0: i32) -> (i32, i32) {
    %c0_i32 = arith.constant 0 : i32
    %c0_i32_0 = arith.constant 0 : i32
    %c0_i32_1 = arith.constant 0 : i32
    return %c0_i32, %c0_i32_0 : i32, i32
  }
  func.func @transform_3(%arg0: i32) -> (i32, i32) {
    %c0_i32 = arith.constant 0 : i32
    %c0_i32_0 = arith.constant 0 : i32
    %c0_i32_1 = arith.constant 0 : i32
    return %c0_i32, %c0_i32_0 : i32, i32
  }
  func.func @transform_4(%arg0: i32) -> (i32, i32) {
    %c0_i32 = arith.constant 0 : i32
    %c0_i32_0 = arith.constant 0 : i32
    %c0_i32_1 = arith.constant 0 : i32
    return %c0_i32, %c0_i32_0 : i32, i32
  }
  func.func @transform_5(%arg0: i32) -> (i32, i32) {
    %c0_i32 = arith.constant 0 : i32
    %c0_i32_0 = arith.constant 0 : i32
    return %arg0, %c0_i32 : i32, i32
  }
}

</mosaic_0001>

<llo_original>
// kernel: tpu_custom_call.1
$region0: #{tpu_custom_call.1}
  #allocation0 [shape = 'u32[]', space=smem, size = 0x4, offset = 0x4, fixed_abs, tag = 'smem constant byte address 0x4 - core index']
  #allocation1 [shape = 'u32[144,128]{1,0:T(1,128)}', space=vmem, size = 0x12000, scoped, tag = 'internal scratch']
  %s0 = inlined_call_operand.vmem [shape: f32[64,48], index: 0, kind: input, shape index: {}]
  %s1 = inlined_call_operand.vmem [shape: f32[1,48], index: 1, kind: input, shape index: {}]
  %s2 = inlined_call_operand.vmem [shape: f32[1,48], index: 2, kind: input, shape index: {}]
  %s3 = inlined_call_operand.vmem [shape: bf16[48,10], index: 3, kind: input, shape index: {}]
  %s4 = inlined_call_operand.vmem [shape: f32[1,10], index: 4, kind: input, shape index: {}]
  %s5 = inlined_call_operand.vmem [shape: f32[64,10], index: 5, kind: output, shape index: {}]
  %s6 = sld [smem:[#allocation0]]
  $region30: #{tpu_custom_call.1} parent=0
    _
  %s8 = ssub.s32 1, %s6
  %s9 = scalar_select 0, %s8, %s6
  // Predicated region
  $region2: #{tpu_custom_call.1} parent=0 // pred_check
    _
  $region3: #{tpu_custom_call.1} parent=0 // pred_check_branch
    %11 = sbr.rel (0) target = $region5
  $region4: #{tpu_custom_call.1} parent=0 // pred_region
    _
  $region5: #{tpu_custom_call.1} parent=0 // pred_fallthru
    _
  // Predicated region
  $region6: #{tpu_custom_call.1} parent=0 // pred_check
    _
  $region7: #{tpu_custom_call.1} parent=0 // pred_check_branch
    %13 = sbr.rel (0) target = $region9
  $region8: #{tpu_custom_call.1} parent=0 // pred_region
    _
  $region9: #{tpu_custom_call.1} parent=0 // pred_fallthru
    _
  // Predicated region
  $region10: #{tpu_custom_call.1} parent=0 // pred_check
    _
  $region11: #{tpu_custom_call.1} parent=0 // pred_check_branch
    %15 = sbr.rel (0) target = $region13
  $region12: #{tpu_custom_call.1} parent=0 // pred_region
    _
  $region13: #{tpu_custom_call.1} parent=0 // pred_fallthru
    _
  // Predicated region
  $region14: #{tpu_custom_call.1} parent=0 // pred_check
    _
  $region15: #{tpu_custom_call.1} parent=0 // pred_check_branch
    %17 = sbr.rel (0) target = $region17
  $region16: #{tpu_custom_call.1} parent=0 // pred_region
    _
  $region17: #{tpu_custom_call.1} parent=0 // pred_fallthru
    _
  // Predicated region
  $region18: #{tpu_custom_call.1} parent=0 // pred_check
    _
  $region19: #{tpu_custom_call.1} parent=0 // pred_check_branch
    %19 = sbr.rel (0) target = $region21
  $region20: #{tpu_custom_call.1} parent=0 // pred_region
    _
  $region21: #{tpu_custom_call.1} parent=0 // pred_fallthru
    _
  %v21 = vld [vmem:[%s0] sm:$0xff]
  %v22 = vld [vmem:[%s0 + $0x8] sm:$0xff]
  %v23 = vld [vmem:[%s0 + $0x10] sm:$0xff]
  %v24 = vld [vmem:[%s0 + $0x18] sm:$0xff]
  %v25 = vld [vmem:[%s0 + $0x20] sm:$0xff]
  %v26 = vld [vmem:[%s0 + $0x28] sm:$0xff]
  %v27 = vld [vmem:[%s0 + $0x30] sm:$0xff]
  %v28 = vld [vmem:[%s0 + $0x38] sm:$0xff]
  %v29 = vld [vmem:[%s1] sm:$0x1]
  %v31 = vlaneseq
  %v32 = vshrl.u32 %v31, 7
  %v33 = vsub.s32 0, %v32
  %v34 = vrot.slane %v29, %v33
  %v36 = vmul.f32 %v21, %v34
  %v37 = vmul.f32 %v22, %v34
  %v38 = vmul.f32 %v23, %v34
  %v39 = vmul.f32 %v24, %v34
  %v40 = vmul.f32 %v25, %v34
  %v41 = vmul.f32 %v26, %v34
  %v42 = vmul.f32 %v27, %v34
  %v43 = vmul.f32 %v28, %v34
  %v44 = vld [vmem:[%s2] sm:$0x1]
  %v46 = vlaneseq
  %v47 = vshrl.u32 %v46, 7
  %v48 = vsub.s32 0, %v47
  %v49 = vrot.slane %v44, %v48
  %v51 = vadd.f32 %v36, %v49
  %v52 = vadd.f32 %v37, %v49
  %v53 = vadd.f32 %v38, %v49
  %v54 = vadd.f32 %v39, %v49
  %v55 = vadd.f32 %v40, %v49
  %v56 = vadd.f32 %v41, %v49
  %v57 = vadd.f32 %v42, %v49
  %v58 = vadd.f32 %v43, %v49
  %v59 = vmax.f32 %v51, 0.0
  %v60 = vmax.f32 %v52, 0.0
  %v61 = vmax.f32 %v53, 0.0
  %v62 = vmax.f32 %v54, 0.0
  %v63 = vmax.f32 %v55, 0.0
  %v64 = vmax.f32 %v56, 0.0
  %v65 = vmax.f32 %v57, 0.0
  %v66 = vmax.f32 %v58, 0.0
  %v67 = vpack.c.bf16 %v60, %v59
  %v68 = vpack.c.bf16 %v62, %v61
  %v69 = vpack.c.bf16 %v64, %v63
  %v70 = vpack.c.bf16 %v66, %v65
  %v71 = vld [vmem:[%s3] sm:$0xf]
  %v72 = vld [vmem:[%s3 + $0x4] sm:$0xf]
  %v73 = vld [vmem:[%s3 + $0x8] sm:$0xf]
  %v74 = vld [vmem:[%s3 + $0xc] sm:$0xf]
  %v75 = vld [vmem:[%s3 + $0x10] sm:$0xf]
  %v76 = vld [vmem:[%s3 + $0x14] sm:$0xf]
  %v77 = vld [vmem:[%s4] sm:$0x1]
  %v79 = vlaneseq
  %v80 = vshrl.u32 %v79, 7
  %v81 = vsub.s32 0, %v80
  %v82 = vrot.slane %v77, %v81
  %v90 = vunpack.c.l.b16 %v71
  %v91 = vunpack.c.l.b16 %v72
  %v92 = vunpack.c.l.b16 %v73
  %v93 = vunpack.c.l.b16 %v74
  %v94 = vunpack.c.l.b16 %v75
  %v95 = vunpack.c.l.b16 %v76
  %v96 = vpack.c.b16 %v91, %v90
  %v97 = vpack.c.b16 %v93, %v92
  %v98 = vpack.c.b16 %v95, %v94
  %vm102 = vcmask 392192
  %v104 = vsel %vm102, %v67, 0
  %v107 = vsel %vm102, %v68, 0
  %v110 = vsel %vm102, %v69, 0
  %v113 = vsel %vm102, %v70, 0
  %115 = vmatprep.subr.bf16.mxu0 0
  %116 = vmatpush1.bf16.msra.mxu0 %v96
  %117 = vmatprep.subr.bf16.mxu0 0
  %118 = vmatpush1.bf16.msra.mxu0 %v97
  %119 = vmatprep.subr.bf16.mxu0 0
  %120 = vmatpush1.bf16.msra.mxu0 %v98
  %121 = vmatprep.subr.bf16.mxu0 0
  %122 = vmatpush1.bf16.msra.mxu0 0
  %123 = vmatprep.subr.bf16.mxu0 0
  %124 = vmatpush1.bf16.msra.mxu0 0
  %125 = vmatprep.subr.bf16.mxu0 0
  %126 = vmatpush1.bf16.msra.mxu0 0
  %127 = vmatprep.subr.bf16.mxu0 0
  %128 = vmatpush1.bf16.msra.mxu0 0
  %129 = vmatprep.subr.bf16.mxu0 0
  %130 = vmatpush1.bf16.msra.mxu0 0
  %131 = vmatprep.subr.bf16.mxu0 0
  %132 = vmatpush1.bf16.msra.mxu0 0
  %133 = vmatprep.subr.bf16.mxu0 0
  %134 = vmatpush1.bf16.msra.mxu0 0
  %135 = vmatprep.subr.bf16.mxu0 0
  %136 = vmatpush1.bf16.msra.mxu0 0
  %137 = vmatprep.subr.bf16.mxu0 0
  %138 = vmatpush1.bf16.msra.mxu0 0
  %139 = vmatprep.subr.bf16.mxu0 0
  %140 = vmatpush1.bf16.msra.mxu0 0
  %141 = vmatprep.subr.bf16.mxu0 0
  %142 = vmatpush1.bf16.msra.mxu0 0
  %143 = vmatprep.subr.bf16.mxu0 0
  %144 = vmatpush1.bf16.msra.mxu0 0
  %145 = vmatprep.subr.bf16.mxu0 0
  %146 = vmatpush1.bf16.msra.mxu0 0
  %147 = vmatprep.mubr.bf16.mxu0 0
  %148 = vmatmul.mubr.bf16.gmra.mrb[0].mxu0 %v104
  %v149 = vpop.f32.mrb[0].mxu0
  %v150 = vadd.f32 %v82, %v149
  %v151 = vpop.f32.mrb[0].mxu0
  %v152 = vpop.f32.mrb[0].mxu0
  %v153 = vadd.f32 %v82, %v152
  %v154 = vpop.f32.mrb[0].mxu0
  %155 = vmatprep.mubr.bf16.mxu0 0
  %156 = vmatmul.mubr.bf16.gmra.mrb[0].mxu0 %v107
  %v157 = vpop.f32.mrb[0].mxu0
  %v158 = vadd.f32 %v82, %v157
  %v159 = vpop.f32.mrb[0].mxu0
  %v160 = vpop.f32.mrb[0].mxu0
  %v161 = vadd.f32 %v82, %v160
  %v162 = vpop.f32.mrb[0].mxu0
  %163 = vmatprep.mubr.bf16.mxu0 0
  %164 = vmatmul.mubr.bf16.gmra.mrb[0].mxu0 %v110
  %v165 = vpop.f32.mrb[0].mxu0
  %v166 = vadd.f32 %v82, %v165
  %v167 = vpop.f32.mrb[0].mxu0
  %v168 = vpop.f32.mrb[0].mxu0
  %v169 = vadd.f32 %v82, %v168
  %v170 = vpop.f32.mrb[0].mxu0
  %171 = vmatprep.mubr.bf16.mxu0 0
  %172 = vmatmul.mubr.bf16.gmra.mrb[0].mxu0 %v113
  %v173 = vpop.f32.mrb[0].mxu0
  %v174 = vadd.f32 %v82, %v173
  %v175 = vpop.f32.mrb[0].mxu0
  %v176 = vpop.f32.mrb[0].mxu0
  %v177 = vadd.f32 %v82, %v176
  %v178 = vpop.f32.mrb[0].mxu0
  %179 = vdwg.mxu0
  %vm180 = vcmask 80896
  %181 = vst.msk [vmem:[%s5] sm:$0xff] %vm180, %v150
  %182 = vst.msk [vmem:[%s5 + $0x8] sm:$0xff] %vm180, %v153
  %183 = vst.msk [vmem:[%s5 + $0x10] sm:$0xff] %vm180, %v158
  %184 = vst.msk [vmem:[%s5 + $0x18] sm:$0xff] %vm180, %v161
  %185 = vst.msk [vmem:[%s5 + $0x20] sm:$0xff] %vm180, %v166
  %186 = vst.msk [vmem:[%s5 + $0x28] sm:$0xff] %vm180, %v169
  %187 = vst.msk [vmem:[%s5 + $0x30] sm:$0xff] %vm180, %v174
  %188 = vst.msk [vmem:[%s5 + $0x38] sm:$0xff] %vm180, %v177
  // Predicated region
  $region22: #{tpu_custom_call.1} parent=0 // pred_check
    _
  $region23: #{tpu_custom_call.1} parent=0 // pred_check_branch
    %190 = sbr.rel (0) target = $region25
  $region24: #{tpu_custom_call.1} parent=0 // pred_region
    _
  $region25: #{tpu_custom_call.1} parent=0 // pred_fallthru
    _
  // Predicated region
  $region26: #{tpu_custom_call.1} parent=0 // pred_check
    _
  $region27: #{tpu_custom_call.1} parent=0 // pred_check_branch
    %192 = sbr.rel (0) target = $region29
  $region28: #{tpu_custom_call.1} parent=0 // pred_region
    _
  $region29: #{tpu_custom_call.1} parent=0 // pred_fallthru
    _

</llo_original>
